<compile_context>
chip_gen: v7x
topology: tpu7x:2x2x1
jax: 0.10.0
libtpu: 0.0.40
codegen_flags: <defaults>
</compile_context>

<pallas_src>
import functools

import jax
import jax.numpy as jnp
from jax import lax
from jax.experimental import pallas as pl
from jax.experimental.pallas import tpu as pltpu

_VMEM_LIMIT = 48 * 1024 * 1024  # below v7x's 64 MiB physical VMEM; fine on v5e/v6e


def _round_up(n, m):
    return ((n + m - 1) // m) * m


def _elu(x):
    return jnp.where(x > 0, x, jnp.exp(x) - 1.0)


# ---------------------------------------------------------------------------
# Kernel 1: fused projection.
#   hfull = x @ [W_all | W a1 | W a2]  (bf16 MXU, f32 accumulate)
#   h_aug[h] = [h_head | ones]  (for MXU-fused rowsum later), f1, f2 = slices.
# ---------------------------------------------------------------------------
def _proj_kernel(x_ref, w_ref, h_ref, f1_ref, f2_ref, *, nheads, fout):
    hfull = jnp.dot(x_ref[...], w_ref[...], preferred_element_type=jnp.float32)
    hfo = nheads * fout
    ones = jnp.ones((hfull.shape[0], 1), dtype=h_ref.dtype)
    for hd in range(nheads):
        blk = hfull[:, hd * fout:(hd + 1) * fout].astype(h_ref.dtype)  # (TM, Fo)
        h_ref[hd, :, :] = jnp.concatenate([blk, ones], axis=1)          # (TM, Fo+1)
    f1_ref[...] = hfull[:, hfo:hfo + nheads].astype(f1_ref.dtype)
    f2_ref[...] = hfull[:, hfo + nheads:hfo + 2 * nheads].astype(f2_ref.dtype)


# ---------------------------------------------------------------------------
# Kernel 2: multi-head attention aggregation over a (row-tile, adj-col-tile) grid
# with block-sparse skipping.
#   e[i,j] = exp(-leakyrelu(f1_i + f2_j)) * adj[i,j]   (bf16 elementwise)
#   acc[h] += e_h @ [h_h | 1]   -> aggregation + rowsum in one MXU matmul
#   finalize: divide, concat heads, elu (concat layers) or elu+log_softmax (final).
# ---------------------------------------------------------------------------
def _attn_kernel(flags_ref, eff_ref, f1_ref, f2t_ref, adj_ref, h_ref, o_ref,
                 acc_ref, *, nheads, fout, alpha, mode):
    i = pl.program_id(0)
    j = pl.program_id(1)

    @pl.when(j == 0)
    def _():
        acc_ref[...] = jnp.zeros_like(acc_ref)

    @pl.when(flags_ref[i, j] != 0)            # skip all-zero adj tiles entirely
    def _():
        adj = adj_ref[...].astype(jnp.bfloat16)         # 0/1 mask, compute dtype
        for hd in range(nheads):
            f1 = f1_ref[:, hd:hd + 1]                   # (TM, 1) bf16
            f2 = f2t_ref[hd:hd + 1, :]                  # (1, TN) bf16
            s = f1 + f2                                 # (TM, TN) bf16
            # exp(-leakyrelu(s)) on edges; matches pyGAT (no max-rescaling).
            e = jnp.exp(-jnp.where(s > 0, s, alpha * s)) * adj
            part = jnp.dot(e, h_ref[hd, :, :],
                           preferred_element_type=jnp.float32)   # (TM, Fo+1)
            acc_ref[hd, :, :] = acc_ref[hd, :, :] + part

    @pl.when(j == pl.num_programs(1) - 1)
    def _():
        cols = []
        for hd in range(nheads):
            a = acc_ref[hd, :, :]                       # (TM, Fo+1) f32
            # last column is the rowsum; guard empty/padded rows.
            inv = pl.reciprocal(jnp.maximum(a[:, fout:fout + 1], 1e-12),
                                approx=True)
            cols.append(a[:, :fout] * inv)
        hp = jnp.concatenate(cols, axis=1) if nheads > 1 else cols[0]
        if mode == "concat":
            out = _elu(hp)
        else:  # "final": SpGAT applies elu then log_softmax
            z = _elu(hp)
            m = jnp.max(z, axis=1, keepdims=True)
            out = z - m - jnp.log(jnp.sum(jnp.exp(z - m), axis=1, keepdims=True))
        o_ref[...] = out.astype(o_ref.dtype)


# ---------------------------------------------------------------------------
# Layer wrapper: all heads of one SpGraphAttentionLayer stack in two pallas_calls.
# All arrays arrive already padded to Np = R * tile rows/cols.
# ---------------------------------------------------------------------------
def gat_layer_fused(x_bf16, adj_i8, flags, eff, w_aug_bf16, *,
                    nheads, fout, alpha, mode, tile):
    Np, fin = x_bf16.shape
    hfo = nheads * fout
    wcols = hfo + 2 * nheads
    assert w_aug_bf16.shape == (fin, wcols)
    R = Np // tile

    # ---- projection ----
    proj_cost = pl.CostEstimate(
        flops=2 * Np * fin * wcols,
        transcendentals=0,
        bytes_accessed=Np * fin * 2 + fin * wcols * 2
        + Np * nheads * (fout + 1) * 2 + 2 * Np * nheads * 2)
    h_aug, f1, f2 = pl.pallas_call(
        functools.partial(_proj_kernel, nheads=nheads, fout=fout),
        grid=(R,),
        in_specs=[
            pl.BlockSpec((tile, fin), lambda i: (i, 0)),
            pl.BlockSpec((fin, wcols), lambda i: (0, 0)),
        ],
        out_specs=[
            pl.BlockSpec((nheads, tile, fout + 1), lambda i: (0, i, 0)),
            pl.BlockSpec((tile, nheads), lambda i: (i, 0)),
            pl.BlockSpec((tile, nheads), lambda i: (i, 0)),
        ],
        out_shape=[
            jax.ShapeDtypeStruct((nheads, Np, fout + 1), jnp.bfloat16),
            jax.ShapeDtypeStruct((Np, nheads), jnp.bfloat16),
            jax.ShapeDtypeStruct((Np, nheads), jnp.bfloat16),
        ],
        compiler_params=pltpu.CompilerParams(
            dimension_semantics=("parallel",),
            vmem_limit_bytes=_VMEM_LIMIT),
        cost_estimate=proj_cost,
    )(x_bf16, w_aug_bf16)

    # Tiny (Np, H) -> (H, Np) transpose so the target-node index lands on lanes.
    f2t = f2.T

    # ---- tiled attention aggregation over nonzero adj blocks ----
    attn_cost = pl.CostEstimate(
        flops=2 * Np * Np * nheads * (fout + 1) + 6 * Np * Np * nheads,
        transcendentals=Np * Np * nheads,
        bytes_accessed=Np * Np + R * Np * nheads * (fout + 1) * 2 + Np * hfo * 4)
    out = pl.pallas_call(
        functools.partial(_attn_kernel, nheads=nheads, fout=fout,
                          alpha=alpha, mode=mode),
        grid_spec=pltpu.PrefetchScalarGridSpec(
            num_scalar_prefetch=2,                      # flags, eff -> SMEM
            grid=(R, R),
            in_specs=[
                pl.BlockSpec((tile, nheads),
                             lambda i, j, fl, ef: (i, 0)),            # f1
                pl.BlockSpec((nheads, tile),
                             lambda i, j, fl, ef: (0, ef[i, j])),     # f2^T
                pl.BlockSpec((tile, tile),
                             lambda i, j, fl, ef: (i, ef[i, j])),     # adj tile
                pl.BlockSpec((nheads, tile, fout + 1),
                             lambda i, j, fl, ef: (0, ef[i, j], 0)),  # h_aug rows
            ],
            out_specs=pl.BlockSpec((tile, hfo), lambda i, j, fl, ef: (i, 0)),
            scratch_shapes=[pltpu.VMEM((nheads, tile, fout + 1), jnp.float32)],
        ),
        out_shape=jax.ShapeDtypeStruct((Np, hfo), jnp.float32),
        compiler_params=pltpu.CompilerParams(
            dimension_semantics=("parallel", "arbitrary"),
            vmem_limit_bytes=_VMEM_LIMIT),
        cost_estimate=attn_cost,
    )(flags, eff, f1, f2t, adj_i8, h_aug)
    return out


def spgat_forward(params, x, adj, *, alpha):
    N, nfeat = x.shape
    nheads = len(params["attentions"])
    nhid = params["attentions"][0][0].shape[1]
    Wo, ao = params["out_att"]
    nclass = Wo.shape[1]

    # Pad N up to a tile multiple (never a single full-size block).
    tile = min(512, _round_up(N, 128))
    Np = _round_up(N, tile)
    R = Np // tile

    # Padded 0/1 adjacency pattern (int8: 4x fewer HBM bytes than f32).
    adj_i8 = jnp.zeros((Np, Np), jnp.int8).at[:N, :N].set(
        (adj != 0).astype(jnp.int8))
    xp = jnp.zeros((Np, nfeat), jnp.bfloat16).at[:N, :].set(
        x.astype(jnp.bfloat16))

    # Block-sparsity metadata (shared by both layers): nonzero flag per tile and
    # "effective column" = last nonzero col tile <= j (dedupes DMA of empty tiles).
    nz = jnp.any(adj_i8.reshape(R, tile, R, tile) != 0, axis=(1, 3))   # (R, R)
    flags = nz.astype(jnp.int32)
    col_ids = jnp.broadcast_to(jnp.arange(R, dtype=jnp.int32)[None, :], (R, R))
    last_nz = lax.cummax(jnp.where(nz, col_ids, jnp.int32(-1)), axis=1)
    eff = jnp.maximum(last_nz, 0).astype(jnp.int32)

    # x = F.dropout(x) -> identity in eval mode.

    # ---- layer 1: all heads fused; f1/f2 folded into the projection matmul ----
    w_all = jnp.concatenate([W for (W, _) in params["attentions"]], axis=1)
    wa1 = jnp.stack([W @ a[:nhid] for (W, a) in params["attentions"]], axis=1)
    wa2 = jnp.stack([W @ a[nhid:] for (W, a) in params["attentions"]], axis=1)
    w_aug = jnp.concatenate([w_all, wa1, wa2], axis=1).astype(jnp.bfloat16)

    xcat = gat_layer_fused(xp, adj_i8, flags, eff, w_aug,
                           nheads=nheads, fout=nhid, alpha=alpha,
                           mode="concat", tile=tile)

    # second F.dropout -> identity in eval mode.

    # ---- output layer (single head): elu + log_softmax fused in the finalize ----
    wo_aug = jnp.concatenate(
        [Wo, (Wo @ ao[:nclass])[:, None], (Wo @ ao[nclass:])[:, None]],
        axis=1).astype(jnp.bfloat16)
    out = gat_layer_fused(xcat.astype(jnp.bfloat16), adj_i8, flags, eff, wo_aug,
                          nheads=1, fout=nclass, alpha=alpha,
                          mode="final", tile=tile)
    return out[:N]


def xavier_normal(key, shape, gain=1.414):
    fan_in, fan_out = shape
    std = gain * (2.0 / (fan_in + fan_out)) ** 0.5
    return std * jax.random.normal(key, shape, dtype=jnp.float32)


def init_spgat(key, nfeat, nhid, nclass, nheads):
    keys = jax.random.split(key, 2 * nheads + 2)
    attentions = []
    for h in range(nheads):
        W = xavier_normal(keys[2 * h], (nfeat, nhid))
        a = xavier_normal(keys[2 * h + 1], (1, 2 * nhid)).reshape(-1)
        attentions.append((W, a))
    Wo = xavier_normal(keys[-2], (nhid * nheads, nclass))
    ao = xavier_normal(keys[-1], (1, 2 * nclass)).reshape(-1)
    return {"attentions": attentions, "out_att": (Wo, ao)}


if __name__ == "__main__":
    key = jax.random.PRNGKey(0)
    k_param, k_x, k_adj = jax.random.split(key, 3)

    # Small graph: N nodes, nfeat input features.
    N, nfeat, nhid, nclass, nheads = 16, 16, 8, 4, 2
    alpha, dropout = 0.2, 0.6   # dropout unused in eval mode

    params = init_spgat(k_param, nfeat, nhid, nclass, nheads)
    x = jax.random.normal(k_x, (N, nfeat), dtype=jnp.float32)
    adj = (jax.random.uniform(k_adj, (N, N)) < 0.3).astype(jnp.float32)
    adj = jnp.maximum(adj, jnp.eye(N, dtype=jnp.float32))  # self-loops -> no empty rows

    out = spgat_forward(params, x, adj, alpha=alpha)
    out = jax.block_until_ready(out)

    assert out.shape == (N, nclass)
    assert bool(jnp.all(jnp.isfinite(out)))
    # log_softmax rows must exponentiate-sum to 1
    assert bool(jnp.allclose(jnp.sum(jnp.exp(out), axis=1), 1.0, atol=1e-3))
    print("KERNEL_OK")
</pallas_src>

<mosaic_0001>
module attributes {stable_mosaic.version = 11 : i64} {
  func.func @_proj_kernel(%arg0: i32, %arg1: memref<128x16xbf16, #tpu.memory_space<vmem>>, %arg2: memref<16x20xbf16, #tpu.memory_space<vmem>>, %arg3: memref<2x128x9xbf16, #tpu.memory_space<vmem>>, %arg4: memref<128x2xbf16, #tpu.memory_space<vmem>>, %arg5: memref<128x2xbf16, #tpu.memory_space<vmem>>) attributes {dimension_semantics = [#tpu.dimension_semantics<parallel>], iteration_bounds = array<i64: 1>, scalar_prefetch = 0 : i64, scratch_operands = 0 : i64, tpu.core_type = #tpu.core_type<tc>, window_params = [{transform_indices = @transform_0, window_bounds = array<i64: 128, 16>}, {pipeline_mode = #tpu.pipeline_mode<synchronous>, transform_indices = @transform_1, window_bounds = array<i64: 16, 20>}, {transform_indices = @transform_2, window_bounds = array<i64: 2, 128, 9>}, {transform_indices = @transform_3, window_bounds = array<i64: 128, 2>}, {transform_indices = @transform_4, window_bounds = array<i64: 128, 2>}]} {
    %c0 = arith.constant 0 : index
    %c0_0 = arith.constant 0 : index
    %0 = vector.load %arg1[%c0, %c0_0] : memref<128x16xbf16, #tpu.memory_space<vmem>>, vector<128x16xbf16>
    %c0_1 = arith.constant 0 : index
    %c0_2 = arith.constant 0 : index
    %1 = vector.load %arg2[%c0_1, %c0_2] : memref<16x20xbf16, #tpu.memory_space<vmem>>, vector<16x20xbf16>
    %cst = arith.constant dense<0.000000e+00> : vector<128x20xf32>
    %2 = tpu.matmul %0, %1, %cst {dimension_numbers = #tpu.dot_dimension_numbers<[1], [0], [0], [1], [0, 0, 1, 1], [], []>} : vector<128x16xbf16>, vector<16x20xbf16>, vector<128x20xf32> -> vector<128x20xf32>
    %cst_3 = arith.constant 1.000000e+00 : bf16
    %3 = vector.broadcast %cst_3 : bf16 to vector<128x1xbf16>
    %4 = vector.extract_strided_slice %2 {offsets = [0, 0], sizes = [128, 8], strides = [1, 1]} : vector<128x20xf32> to vector<128x8xf32>
    %5 = arith.truncf %4 : vector<128x8xf32> to vector<128x8xbf16>
    %6 = tpu.concatenate %5, %3 in 1 : vector<128x8xbf16>, vector<128x1xbf16> -> vector<128x9xbf16>
    %c0_4 = arith.constant 0 : index
    %c0_5 = arith.constant 0 : index
    %c0_6 = arith.constant 0 : index
    %7 = vector.load %arg3[%c0_4, %c0_5, %c0_6] : memref<2x128x9xbf16, #tpu.memory_space<vmem>>, vector<1x128x9xbf16>
    %8 = vector.shape_cast %7 : vector<1x128x9xbf16> to vector<128x9xbf16>
    %9 = vector.shape_cast %6 : vector<128x9xbf16> to vector<1x128x9xbf16>
    tpu.vector_store %arg3[%c0_4, %c0_5, %c0_6], %9 {strides = array<i32>} : memref<2x128x9xbf16, #tpu.memory_space<vmem>>, vector<1x128x9xbf16>,
    %10 = vector.extract_strided_slice %2 {offsets = [0, 8], sizes = [128, 8], strides = [1, 1]} : vector<128x20xf32> to vector<128x8xf32>
    %11 = arith.truncf %10 : vector<128x8xf32> to vector<128x8xbf16>
    %12 = tpu.concatenate %11, %3 in 1 : vector<128x8xbf16>, vector<128x1xbf16> -> vector<128x9xbf16>
    %c1 = arith.constant 1 : index
    %c0_7 = arith.constant 0 : index
    %c0_8 = arith.constant 0 : index
    %13 = vector.load %arg3[%c1, %c0_7, %c0_8] : memref<2x128x9xbf16, #tpu.memory_space<vmem>>, vector<1x128x9xbf16>
    %14 = vector.shape_cast %13 : vector<1x128x9xbf16> to vector<128x9xbf16>
    %15 = vector.shape_cast %12 : vector<128x9xbf16> to vector<1x128x9xbf16>
    tpu.vector_store %arg3[%c1, %c0_7, %c0_8], %15 {strides = array<i32>} : memref<2x128x9xbf16, #tpu.memory_space<vmem>>, vector<1x128x9xbf16>,
    %16 = vector.extract_strided_slice %2 {offsets = [0, 16], sizes = [128, 2], strides = [1, 1]} : vector<128x20xf32> to vector<128x2xf32>
    %17 = arith.truncf %16 : vector<128x2xf32> to vector<128x2xbf16>
    %c0_9 = arith.constant 0 : index
    %c0_10 = arith.constant 0 : index
    %18 = vector.load %arg4[%c0_9, %c0_10] : memref<128x2xbf16, #tpu.memory_space<vmem>>, vector<128x2xbf16>
    tpu.vector_store %arg4[%c0_9, %c0_10], %17 {strides = array<i32>} : memref<128x2xbf16, #tpu.memory_space<vmem>>, vector<128x2xbf16>,
    %19 = vector.extract_strided_slice %2 {offsets = [0, 18], sizes = [128, 2], strides = [1, 1]} : vector<128x20xf32> to vector<128x2xf32>
    %20 = arith.truncf %19 : vector<128x2xf32> to vector<128x2xbf16>
    %c0_11 = arith.constant 0 : index
    %c0_12 = arith.constant 0 : index
    %21 = vector.load %arg5[%c0_11, %c0_12] : memref<128x2xbf16, #tpu.memory_space<vmem>>, vector<128x2xbf16>
    tpu.vector_store %arg5[%c0_11, %c0_12], %20 {strides = array<i32>} : memref<128x2xbf16, #tpu.memory_space<vmem>>, vector<128x2xbf16>,
    return
  }
  func.func @transform_0(%arg0: i32) -> (i32, i32) {
    %c0_i32 = arith.constant 0 : i32
    %c0_i32_0 = arith.constant 0 : i32
    return %arg0, %c0_i32 : i32, i32
  }
  func.func @transform_1(%arg0: i32) -> (i32, i32) {
    %c0_i32 = arith.constant 0 : i32
    %c0_i32_0 = arith.constant 0 : i32
    %c0_i32_1 = arith.constant 0 : i32
    return %c0_i32, %c0_i32_0 : i32, i32
  }
  func.func @transform_2(%arg0: i32) -> (i32, i32, i32) {
    %c0_i32 = arith.constant 0 : i32
    %c0_i32_0 = arith.constant 0 : i32
    %c0_i32_1 = arith.constant 0 : i32
    return %c0_i32, %arg0, %c0_i32_0 : i32, i32, i32
  }
  func.func @transform_3(%arg0: i32) -> (i32, i32) {
    %c0_i32 = arith.constant 0 : i32
    %c0_i32_0 = arith.constant 0 : i32
    return %arg0, %c0_i32 : i32, i32
  }
  func.func @transform_4(%arg0: i32) -> (i32, i32) {
    %c0_i32 = arith.constant 0 : i32
    %c0_i32_0 = arith.constant 0 : i32
    return %arg0, %c0_i32 : i32, i32
  }
}

</mosaic_0001>

<llo_original>
// kernel: tpu_custom_call.1
$region0: #{tpu_custom_call.1}
  #allocation0 [shape = 'u32[]', space=smem, size = 0x4, offset = 0x4, fixed_abs, tag = 'smem constant byte address 0x4 - core index']
  #allocation1 [shape = 'u32[144,128]{1,0:T(1,128)}', space=vmem, size = 0x12000, scoped, tag = 'internal scratch']
  %s0 = inlined_call_operand.vmem [shape: bf16[128,16], index: 0, kind: input, shape index: {}]
  %s1 = inlined_call_operand.vmem [shape: bf16[16,20], index: 1, kind: input, shape index: {}]
  %s2 = inlined_call_operand.vmem [shape: bf16[2,128,9], index: 2, kind: output, shape index: {0}]
  %s3 = inlined_call_operand.vmem [shape: bf16[128,2], index: 3, kind: output, shape index: {1}]
  %s4 = inlined_call_operand.vmem [shape: bf16[128,2], index: 4, kind: output, shape index: {2}]
  %5 = xla_tuple %s2, %s3, %s4
  %s6 = sld [smem:[#allocation0]]
  $region34: #{tpu_custom_call.1} parent=0
    _
  %s8 = ssub.s32 1, %s6
  %s9 = scalar_select 0, %s8, %s6
  // Predicated region
  $region2: #{tpu_custom_call.1} parent=0 // pred_check
    _
  $region3: #{tpu_custom_call.1} parent=0 // pred_check_branch
    %11 = sbr.rel (0) target = $region5
  $region4: #{tpu_custom_call.1} parent=0 // pred_region
    _
  $region5: #{tpu_custom_call.1} parent=0 // pred_fallthru
    _
  // Predicated region
  $region6: #{tpu_custom_call.1} parent=0 // pred_check
    _
  $region7: #{tpu_custom_call.1} parent=0 // pred_check_branch
    %13 = sbr.rel (0) target = $region9
  $region8: #{tpu_custom_call.1} parent=0 // pred_region
    _
  $region9: #{tpu_custom_call.1} parent=0 // pred_fallthru
    _
  %v16 = vld [vmem:[%s0] sm:$0xf]
  %v17 = vld [vmem:[%s0 + $0x4] sm:$0xf]
  %v18 = vld [vmem:[%s0 + $0x8] sm:$0xf]
  %v19 = vld [vmem:[%s0 + $0xc] sm:$0xf]
  %v20 = vld [vmem:[%s0 + $0x10] sm:$0xf]
  %v21 = vld [vmem:[%s0 + $0x14] sm:$0xf]
  %v22 = vld [vmem:[%s0 + $0x18] sm:$0xf]
  %v23 = vld [vmem:[%s0 + $0x1c] sm:$0xf]
  %v24 = vld [vmem:[%s0 + $0x20] sm:$0xf]
  %v25 = vld [vmem:[%s0 + $0x24] sm:$0xf]
  %v26 = vld [vmem:[%s0 + $0x28] sm:$0xf]
  %v27 = vld [vmem:[%s0 + $0x2c] sm:$0xf]
  %v28 = vld [vmem:[%s0 + $0x30] sm:$0xf]
  %v29 = vld [vmem:[%s0 + $0x34] sm:$0xf]
  %v30 = vld [vmem:[%s0 + $0x38] sm:$0xf]
  %v31 = vld [vmem:[%s0 + $0x3c] sm:$0xf]
  %v32 = vld [vmem:[%s1] sm:$0xf]
  %v33 = vld [vmem:[%s1 + $0x4] sm:$0xf]
  %v50 = vunpack.c.l.b16 %v16
  %v51 = vunpack.c.l.b16 %v17
  %v52 = vunpack.c.l.b16 %v18
  %v53 = vunpack.c.l.b16 %v19
  %v54 = vunpack.c.l.b16 %v20
  %v55 = vunpack.c.l.b16 %v21
  %v56 = vunpack.c.l.b16 %v22
  %v57 = vunpack.c.l.b16 %v23
  %v58 = vunpack.c.l.b16 %v24
  %v59 = vunpack.c.l.b16 %v25
  %v60 = vunpack.c.l.b16 %v26
  %v61 = vunpack.c.l.b16 %v27
  %v62 = vunpack.c.l.b16 %v28
  %v63 = vunpack.c.l.b16 %v29
  %v64 = vunpack.c.l.b16 %v30
  %v65 = vunpack.c.l.b16 %v31
  %v66 = vpack.c.b16 %v51, %v50
  %v67 = vpack.c.b16 %v53, %v52
  %v68 = vpack.c.b16 %v55, %v54
  %v69 = vpack.c.b16 %v57, %v56
  %v70 = vpack.c.b16 %v59, %v58
  %v71 = vpack.c.b16 %v61, %v60
  %v72 = vpack.c.b16 %v63, %v62
  %v73 = vpack.c.b16 %v65, %v64
  %v76 = vunpack.c.l.b16 %v32
  %v77 = vunpack.c.l.b16 %v33
  %v78 = vpack.c.b16 %v77, %v76
  %vm80 = vcmask 130048
  %v82 = vsel %vm80, %v66, 0
  %v85 = vsel %vm80, %v67, 0
  %v88 = vsel %vm80, %v68, 0
  %v91 = vsel %vm80, %v69, 0
  %v94 = vsel %vm80, %v70, 0
  %v97 = vsel %vm80, %v71, 0
  %v100 = vsel %vm80, %v72, 0
  %v103 = vsel %vm80, %v73, 0
  %105 = vmatprep.subr.bf16.mxu0 0
  %106 = vmatpush1.bf16.msra.mxu0 %v78
  %107 = vmatprep.subr.bf16.mxu0 0
  %108 = vmatpush1.bf16.msra.mxu0 0
  %109 = vmatprep.subr.bf16.mxu0 0
  %110 = vmatpush1.bf16.msra.mxu0 0
  %111 = vmatprep.subr.bf16.mxu0 0
  %112 = vmatpush1.bf16.msra.mxu0 0
  %113 = vmatprep.subr.bf16.mxu0 0
  %114 = vmatpush1.bf16.msra.mxu0 0
  %115 = vmatprep.subr.bf16.mxu0 0
  %116 = vmatpush1.bf16.msra.mxu0 0
  %117 = vmatprep.subr.bf16.mxu0 0
  %118 = vmatpush1.bf16.msra.mxu0 0
  %119 = vmatprep.subr.bf16.mxu0 0
  %120 = vmatpush1.bf16.msra.mxu0 0
  %121 = vmatprep.subr.bf16.mxu0 0
  %122 = vmatpush1.bf16.msra.mxu0 0
  %123 = vmatprep.subr.bf16.mxu0 0
  %124 = vmatpush1.bf16.msra.mxu0 0
  %125 = vmatprep.subr.bf16.mxu0 0
  %126 = vmatpush1.bf16.msra.mxu0 0
  %127 = vmatprep.subr.bf16.mxu0 0
  %128 = vmatpush1.bf16.msra.mxu0 0
  %129 = vmatprep.subr.bf16.mxu0 0
  %130 = vmatpush1.bf16.msra.mxu0 0
  %131 = vmatprep.subr.bf16.mxu0 0
  %132 = vmatpush1.bf16.msra.mxu0 0
  %133 = vmatprep.subr.bf16.mxu0 0
  %134 = vmatpush1.bf16.msra.mxu0 0
  %135 = vmatprep.subr.bf16.mxu0 0
  %136 = vmatpush1.bf16.msra.mxu0 0
  %137 = vmatprep.mubr.bf16.mxu0 0
  %138 = vmatmul.mubr.bf16.gmra.mrb[0].mxu0 %v82
  %v139 = vpop.f32.mrb[0].mxu0
  %v140 = vadd.f32 0.0, %v139
  %v141 = vpop.f32.mrb[0].mxu0
  %v142 = vpop.f32.mrb[0].mxu0
  %v143 = vadd.f32 0.0, %v142
  %v144 = vpop.f32.mrb[0].mxu0
  %145 = vmatprep.mubr.bf16.mxu0 0
  %146 = vmatmul.mubr.bf16.gmra.mrb[0].mxu0 %v85
  %v147 = vpop.f32.mrb[0].mxu0
  %v148 = vadd.f32 0.0, %v147
  %v149 = vpop.f32.mrb[0].mxu0
  %v150 = vpop.f32.mrb[0].mxu0
  %v151 = vadd.f32 0.0, %v150
  %v152 = vpop.f32.mrb[0].mxu0
  %153 = vmatprep.mubr.bf16.mxu0 0
  %154 = vmatmul.mubr.bf16.gmra.mrb[0].mxu0 %v88
  %v155 = vpop.f32.mrb[0].mxu0
  %v156 = vadd.f32 0.0, %v155
  %v157 = vpop.f32.mrb[0].mxu0
  %v158 = vpop.f32.mrb[0].mxu0
  %v159 = vadd.f32 0.0, %v158
  %v160 = vpop.f32.mrb[0].mxu0
  %161 = vmatprep.mubr.bf16.mxu0 0
  %162 = vmatmul.mubr.bf16.gmra.mrb[0].mxu0 %v91
  %v163 = vpop.f32.mrb[0].mxu0
  %v164 = vadd.f32 0.0, %v163
  %v165 = vpop.f32.mrb[0].mxu0
  %v166 = vpop.f32.mrb[0].mxu0
  %v167 = vadd.f32 0.0, %v166
  %v168 = vpop.f32.mrb[0].mxu0
  %169 = vmatprep.mubr.bf16.mxu0 0
  %170 = vmatmul.mubr.bf16.gmra.mrb[0].mxu0 %v94
  %v171 = vpop.f32.mrb[0].mxu0
  %v172 = vadd.f32 0.0, %v171
  %v173 = vpop.f32.mrb[0].mxu0
  %v174 = vpop.f32.mrb[0].mxu0
  %v175 = vadd.f32 0.0, %v174
  %v176 = vpop.f32.mrb[0].mxu0
  %177 = vmatprep.mubr.bf16.mxu0 0
  %178 = vmatmul.mubr.bf16.gmra.mrb[0].mxu0 %v97
  %v179 = vpop.f32.mrb[0].mxu0
  %v180 = vadd.f32 0.0, %v179
  %v181 = vpop.f32.mrb[0].mxu0
  %v182 = vpop.f32.mrb[0].mxu0
  %v183 = vadd.f32 0.0, %v182
  %v184 = vpop.f32.mrb[0].mxu0
  %185 = vmatprep.mubr.bf16.mxu0 0
  %186 = vmatmul.mubr.bf16.gmra.mrb[0].mxu0 %v100
  %v187 = vpop.f32.mrb[0].mxu0
  %v188 = vadd.f32 0.0, %v187
  %v189 = vpop.f32.mrb[0].mxu0
  %v190 = vpop.f32.mrb[0].mxu0
  %v191 = vadd.f32 0.0, %v190
  %v192 = vpop.f32.mrb[0].mxu0
  %193 = vmatprep.mubr.bf16.mxu0 0
  %194 = vmatmul.mubr.bf16.gmra.mrb[0].mxu0 %v103
  %v195 = vpop.f32.mrb[0].mxu0
  %v196 = vadd.f32 0.0, %v195
  %v197 = vpop.f32.mrb[0].mxu0
  %v198 = vpop.f32.mrb[0].mxu0
  %v199 = vadd.f32 0.0, %v198
  %v200 = vpop.f32.mrb[0].mxu0
  %201 = vdwg.mxu0
  %v202 = vpack.c.bf16 %v143, %v140
  %v203 = vpack.c.bf16 %v151, %v148
  %v204 = vpack.c.bf16 %v159, %v156
  %v205 = vpack.c.bf16 %v167, %v164
  %v206 = vpack.c.bf16 %v175, %v172
  %v207 = vpack.c.bf16 %v183, %v180
  %v208 = vpack.c.bf16 %v191, %v188
  %v209 = vpack.c.bf16 %v199, %v196
  %vm210 = vcmask 64512
  %v213 = vsel %vm210, %v202, 1065369472
  %v215 = vsel %vm210, %v203, 1065369472
  %v217 = vsel %vm210, %v204, 1065369472
  %v219 = vsel %vm210, %v205, 1065369472
  %v221 = vsel %vm210, %v206, 1065369472
  %v223 = vsel %vm210, %v207, 1065369472
  %v225 = vsel %vm210, %v208, 1065369472
  %v227 = vsel %vm210, %v209, 1065369472
  %v236 = vunpack.c.l.b16 %v213
  %v237 = vunpack.c.h.b16 %v213
  %v238 = vunpack.c.l.b16 %v215
  %v239 = vunpack.c.h.b16 %v215
  %v240 = vunpack.c.l.b16 %v217
  %v241 = vunpack.c.h.b16 %v217
  %v242 = vunpack.c.l.b16 %v219
  %v243 = vunpack.c.h.b16 %v219
  %v244 = vunpack.c.l.b16 %v221
  %v245 = vunpack.c.h.b16 %v221
  %v246 = vunpack.c.l.b16 %v223
  %v247 = vunpack.c.h.b16 %v223
  %v248 = vunpack.c.l.b16 %v225
  %v249 = vunpack.c.h.b16 %v225
  %v250 = vunpack.c.l.b16 %v227
  %v251 = vunpack.c.h.b16 %v227
  %v252 = vpack.c.b16 %v236, %v236
  %v253 = vpack.c.b16 %v237, %v237
  %v254 = vpack.c.b16 %v238, %v238
  %v255 = vpack.c.b16 %v239, %v239
  %v256 = vpack.c.b16 %v240, %v240
  %v257 = vpack.c.b16 %v241, %v241
  %v258 = vpack.c.b16 %v242, %v242
  %v259 = vpack.c.b16 %v243, %v243
  %v260 = vpack.c.b16 %v244, %v244
  %v261 = vpack.c.b16 %v245, %v245
  %v262 = vpack.c.b16 %v246, %v246
  %v263 = vpack.c.b16 %v247, %v247
  %v264 = vpack.c.b16 %v248, %v248
  %v265 = vpack.c.b16 %v249, %v249
  %v266 = vpack.c.b16 %v250, %v250
  %v267 = vpack.c.b16 %v251, %v251
  %vm284 = vcmask 68608
  %285 = vst.msk [vmem:[%s2] sm:$0xf] %vm284, %v252
  %286 = vst.msk [vmem:[%s2 + $0x4] sm:$0xf] %vm284, %v253
  %287 = vst.msk [vmem:[%s2 + $0x8] sm:$0xf] %vm284, %v254
  %288 = vst.msk [vmem:[%s2 + $0xc] sm:$0xf] %vm284, %v255
  %289 = vst.msk [vmem:[%s2 + $0x10] sm:$0xf] %vm284, %v256
  %290 = vst.msk [vmem:[%s2 + $0x14] sm:$0xf] %vm284, %v257
  %291 = vst.msk [vmem:[%s2 + $0x18] sm:$0xf] %vm284, %v258
  %292 = vst.msk [vmem:[%s2 + $0x1c] sm:$0xf] %vm284, %v259
  %293 = vst.msk [vmem:[%s2 + $0x20] sm:$0xf] %vm284, %v260
  %294 = vst.msk [vmem:[%s2 + $0x24] sm:$0xf] %vm284, %v261
  %295 = vst.msk [vmem:[%s2 + $0x28] sm:$0xf] %vm284, %v262
  %296 = vst.msk [vmem:[%s2 + $0x2c] sm:$0xf] %vm284, %v263
  %297 = vst.msk [vmem:[%s2 + $0x30] sm:$0xf] %vm284, %v264
  %298 = vst.msk [vmem:[%s2 + $0x34] sm:$0xf] %vm284, %v265
  %299 = vst.msk [vmem:[%s2 + $0x38] sm:$0xf] %vm284, %v266
  %300 = vst.msk [vmem:[%s2 + $0x3c] sm:$0xf] %vm284, %v267
  %309 = vrot.lane.b32.xlu0 %v202, 120
  %v310 = vpop.permute.xlu0 %309
  %311 = vrot.lane.b32.xlu0 %v203, 120
  %v312 = vpop.permute.xlu0 %311
  %313 = vrot.lane.b32.xlu0 %v204, 120
  %v314 = vpop.permute.xlu0 %313
  %315 = vrot.lane.b32.xlu0 %v205, 120
  %v316 = vpop.permute.xlu0 %315
  %317 = vrot.lane.b32.xlu0 %v206, 120
  %v318 = vpop.permute.xlu0 %317
  %319 = vrot.lane.b32.xlu0 %v207, 120
  %v320 = vpop.permute.xlu0 %319
  %321 = vrot.lane.b32.xlu0 %v208, 120
  %v322 = vpop.permute.xlu0 %321
  %323 = vrot.lane.b32.xlu0 %v209, 120
  %v324 = vpop.permute.xlu0 %323
  %v326 = vsel %vm210, %v310, 1065369472
  %v328 = vsel %vm210, %v312, 1065369472
  %v330 = vsel %vm210, %v314, 1065369472
  %v332 = vsel %vm210, %v316, 1065369472
  %v334 = vsel %vm210, %v318, 1065369472
  %v336 = vsel %vm210, %v320, 1065369472
  %v338 = vsel %vm210, %v322, 1065369472
  %v340 = vsel %vm210, %v324, 1065369472
  %v349 = vunpack.c.l.b16 %v326
  %v350 = vunpack.c.h.b16 %v326
  %v351 = vunpack.c.l.b16 %v328
  %v352 = vunpack.c.h.b16 %v328
  %v353 = vunpack.c.l.b16 %v330
  %v354 = vunpack.c.h.b16 %v330
  %v355 = vunpack.c.l.b16 %v332
  %v356 = vunpack.c.h.b16 %v332
  %v357 = vunpack.c.l.b16 %v334
  %v358 = vunpack.c.h.b16 %v334
  %v359 = vunpack.c.l.b16 %v336
  %v360 = vunpack.c.h.b16 %v336
  %v361 = vunpack.c.l.b16 %v338
  %v362 = vunpack.c.h.b16 %v338
  %v363 = vunpack.c.l.b16 %v340
  %v364 = vunpack.c.h.b16 %v340
  %v365 = vpack.c.b16 %v349, %v349
  %v366 = vpack.c.b16 %v350, %v350
  %v367 = vpack.c.b16 %v351, %v351
  %v368 = vpack.c.b16 %v352, %v352
  %v369 = vpack.c.b16 %v353, %v353
  %v370 = vpack.c.b16 %v354, %v354
  %v371 = vpack.c.b16 %v355, %v355
  %v372 = vpack.c.b16 %v356, %v356
  %v373 = vpack.c.b16 %v357, %v357
  %v374 = vpack.c.b16 %v358, %v358
  %v375 = vpack.c.b16 %v359, %v359
  %v376 = vpack.c.b16 %v360, %v360
  %v377 = vpack.c.b16 %v361, %v361
  %v378 = vpack.c.b16 %v362, %v362
  %v379 = vpack.c.b16 %v363, %v363
  %v380 = vpack.c.b16 %v364, %v364
  %s397 = scalar_lea.vmem %s2, 64
  %398 = vst.msk [vmem:[%s397] sm:$0xf] %vm284, %v365
  %399 = vst.msk [vmem:[%s397 + $0x4] sm:$0xf] %vm284, %v366
  %400 = vst.msk [vmem:[%s397 + $0x8] sm:$0xf] %vm284, %v367
  %401 = vst.msk [vmem:[%s397 + $0xc] sm:$0xf] %vm284, %v368
  %402 = vst.msk [vmem:[%s397 + $0x10] sm:$0xf] %vm284, %v369
  %403 = vst.msk [vmem:[%s397 + $0x14] sm:$0xf] %vm284, %v370
  %404 = vst.msk [vmem:[%s397 + $0x18] sm:$0xf] %vm284, %v371
  %405 = vst.msk [vmem:[%s397 + $0x1c] sm:$0xf] %vm284, %v372
  %406 = vst.msk [vmem:[%s397 + $0x20] sm:$0xf] %vm284, %v373
  %407 = vst.msk [vmem:[%s397 + $0x24] sm:$0xf] %vm284, %v374
  %408 = vst.msk [vmem:[%s397 + $0x28] sm:$0xf] %vm284, %v375
  %409 = vst.msk [vmem:[%s397 + $0x2c] sm:$0xf] %vm284, %v376
  %410 = vst.msk [vmem:[%s397 + $0x30] sm:$0xf] %vm284, %v377
  %411 = vst.msk [vmem:[%s397 + $0x34] sm:$0xf] %vm284, %v378
  %412 = vst.msk [vmem:[%s397 + $0x38] sm:$0xf] %vm284, %v379
  %413 = vst.msk [vmem:[%s397 + $0x3c] sm:$0xf] %vm284, %v380
  %v414 = vunpack.c.l.b16 %v202
  %v415 = vunpack.c.h.b16 %v202
  %v416 = vunpack.c.l.b16 %v203
  %v417 = vunpack.c.h.b16 %v203
  %v418 = vunpack.c.l.b16 %v204
  %v419 = vunpack.c.h.b16 %v204
  %v420 = vunpack.c.l.b16 %v205
  %v421 = vunpack.c.h.b16 %v205
  %v422 = vunpack.c.l.b16 %v206
  %v423 = vunpack.c.h.b16 %v206
  %v424 = vunpack.c.l.b16 %v207
  %v425 = vunpack.c.h.b16 %v207
  %v426 = vunpack.c.l.b16 %v208
  %v427 = vunpack.c.h.b16 %v208
  %v428 = vunpack.c.l.b16 %v209
  %v429 = vunpack.c.h.b16 %v209
  %v430 = vpack.c.b16 %v414, %v414
  %v431 = vpack.c.b16 %v415, %v415
  %v432 = vpack.c.b16 %v416, %v416
  %v433 = vpack.c.b16 %v417, %v417
  %v434 = vpack.c.b16 %v418, %v418
  %v435 = vpack.c.b16 %v419, %v419
  %v436 = vpack.c.b16 %v420, %v420
  %v437 = vpack.c.b16 %v421, %v421
  %v438 = vpack.c.b16 %v422, %v422
  %v439 = vpack.c.b16 %v423, %v423
  %v440 = vpack.c.b16 %v424, %v424
  %v441 = vpack.c.b16 %v425, %v425
  %v442 = vpack.c.b16 %v426, %v426
  %v443 = vpack.c.b16 %v427, %v427
  %v444 = vpack.c.b16 %v428, %v428
  %v445 = vpack.c.b16 %v429, %v429
  %446 = vrot.lane.b32.xlu0 %v430, 112
  %v447 = vpop.permute.xlu0 %446
  %448 = vrot.lane.b32.xlu0 %v431, 112
  %v449 = vpop.permute.xlu0 %448
  %450 = vrot.lane.b32.xlu0 %v432, 112
  %v451 = vpop.permute.xlu0 %450
  %452 = vrot.lane.b32.xlu0 %v433, 112
  %v453 = vpop.permute.xlu0 %452
  %454 = vrot.lane.b32.xlu0 %v434, 112
  %v455 = vpop.permute.xlu0 %454
  %456 = vrot.lane.b32.xlu0 %v435, 112
  %v457 = vpop.permute.xlu0 %456
  %458 = vrot.lane.b32.xlu0 %v436, 112
  %v459 = vpop.permute.xlu0 %458
  %460 = vrot.lane.b32.xlu0 %v437, 112
  %v461 = vpop.permute.xlu0 %460
  %462 = vrot.lane.b32.xlu0 %v438, 112
  %v463 = vpop.permute.xlu0 %462
  %464 = vrot.lane.b32.xlu0 %v439, 112
  %v465 = vpop.permute.xlu0 %464
  %466 = vrot.lane.b32.xlu0 %v440, 112
  %v467 = vpop.permute.xlu0 %466
  %468 = vrot.lane.b32.xlu0 %v441, 112
  %v469 = vpop.permute.xlu0 %468
  %470 = vrot.lane.b32.xlu0 %v442, 112
  %v471 = vpop.permute.xlu0 %470
  %472 = vrot.lane.b32.xlu0 %v443, 112
  %v473 = vpop.permute.xlu0 %472
  %474 = vrot.lane.b32.xlu0 %v444, 112
  %v475 = vpop.permute.xlu0 %474
  %476 = vrot.lane.b32.xlu0 %v445, 112
  %v477 = vpop.permute.xlu0 %476
  %vm494 = vcmask 11264
  %495 = vst.msk [vmem:[%s3] sm:$0xf] %vm494, %v447
  %496 = vst.msk [vmem:[%s3 + $0x4] sm:$0xf] %vm494, %v449
  %497 = vst.msk [vmem:[%s3 + $0x8] sm:$0xf] %vm494, %v451
  %498 = vst.msk [vmem:[%s3 + $0xc] sm:$0xf] %vm494, %v453
  %499 = vst.msk [vmem:[%s3 + $0x10] sm:$0xf] %vm494, %v455
  %500 = vst.msk [vmem:[%s3 + $0x14] sm:$0xf] %vm494, %v457
  %501 = vst.msk [vmem:[%s3 + $0x18] sm:$0xf] %vm494, %v459
  %502 = vst.msk [vmem:[%s3 + $0x1c] sm:$0xf] %vm494, %v461
  %503 = vst.msk [vmem:[%s3 + $0x20] sm:$0xf] %vm494, %v463
  %504 = vst.msk [vmem:[%s3 + $0x24] sm:$0xf] %vm494, %v465
  %505 = vst.msk [vmem:[%s3 + $0x28] sm:$0xf] %vm494, %v467
  %506 = vst.msk [vmem:[%s3 + $0x2c] sm:$0xf] %vm494, %v469
  %507 = vst.msk [vmem:[%s3 + $0x30] sm:$0xf] %vm494, %v471
  %508 = vst.msk [vmem:[%s3 + $0x34] sm:$0xf] %vm494, %v473
  %509 = vst.msk [vmem:[%s3 + $0x38] sm:$0xf] %vm494, %v475
  %510 = vst.msk [vmem:[%s3 + $0x3c] sm:$0xf] %vm494, %v477
  %511 = vrot.lane.b32.xlu0 %v430, 110
  %v512 = vpop.permute.xlu0 %511
  %513 = vrot.lane.b32.xlu0 %v431, 110
  %v514 = vpop.permute.xlu0 %513
  %515 = vrot.lane.b32.xlu0 %v432, 110
  %v516 = vpop.permute.xlu0 %515
  %517 = vrot.lane.b32.xlu0 %v433, 110
  %v518 = vpop.permute.xlu0 %517
  %519 = vrot.lane.b32.xlu0 %v434, 110
  %v520 = vpop.permute.xlu0 %519
  %521 = vrot.lane.b32.xlu0 %v435, 110
  %v522 = vpop.permute.xlu0 %521
  %523 = vrot.lane.b32.xlu0 %v436, 110
  %v524 = vpop.permute.xlu0 %523
  %525 = vrot.lane.b32.xlu0 %v437, 110
  %v526 = vpop.permute.xlu0 %525
  %527 = vrot.lane.b32.xlu0 %v438, 110
  %v528 = vpop.permute.xlu0 %527
  %529 = vrot.lane.b32.xlu0 %v439, 110
  %v530 = vpop.permute.xlu0 %529
  %531 = vrot.lane.b32.xlu0 %v440, 110
  %v532 = vpop.permute.xlu0 %531
  %533 = vrot.lane.b32.xlu0 %v441, 110
  %v534 = vpop.permute.xlu0 %533
  %535 = vrot.lane.b32.xlu0 %v442, 110
  %v536 = vpop.permute.xlu0 %535
  %537 = vrot.lane.b32.xlu0 %v443, 110
  %v538 = vpop.permute.xlu0 %537
  %539 = vrot.lane.b32.xlu0 %v444, 110
  %v540 = vpop.permute.xlu0 %539
  %541 = vrot.lane.b32.xlu0 %v445, 110
  %v542 = vpop.permute.xlu0 %541
  %559 = vst.msk [vmem:[%s4] sm:$0xf] %vm494, %v512
  %560 = vst.msk [vmem:[%s4 + $0x4] sm:$0xf] %vm494, %v514
  %561 = vst.msk [vmem:[%s4 + $0x8] sm:$0xf] %vm494, %v516
  %562 = vst.msk [vmem:[%s4 + $0xc] sm:$0xf] %vm494, %v518
  %563 = vst.msk [vmem:[%s4 + $0x10] sm:$0xf] %vm494, %v520
  %564 = vst.msk [vmem:[%s4 + $0x14] sm:$0xf] %vm494, %v522
  %565 = vst.msk [vmem:[%s4 + $0x18] sm:$0xf] %vm494, %v524
  %566 = vst.msk [vmem:[%s4 + $0x1c] sm:$0xf] %vm494, %v526
  %567 = vst.msk [vmem:[%s4 + $0x20] sm:$0xf] %vm494, %v528
  %568 = vst.msk [vmem:[%s4 + $0x24] sm:$0xf] %vm494, %v530
  %569 = vst.msk [vmem:[%s4 + $0x28] sm:$0xf] %vm494, %v532
  %570 = vst.msk [vmem:[%s4 + $0x2c] sm:$0xf] %vm494, %v534
  %571 = vst.msk [vmem:[%s4 + $0x30] sm:$0xf] %vm494, %v536
  %572 = vst.msk [vmem:[%s4 + $0x34] sm:$0xf] %vm494, %v538
  %573 = vst.msk [vmem:[%s4 + $0x38] sm:$0xf] %vm494, %v540
  %574 = vst.msk [vmem:[%s4 + $0x3c] sm:$0xf] %vm494, %v542
  // Predicated region
  $region10: #{tpu_custom_call.1} parent=0 // pred_check
    _
  $region11: #{tpu_custom_call.1} parent=0 // pred_check_branch
    %576 = sbr.rel (0) target = $region13
  $region12: #{tpu_custom_call.1} parent=0 // pred_region
    _
  $region13: #{tpu_custom_call.1} parent=0 // pred_fallthru
    _
  // Predicated region
  $region14: #{tpu_custom_call.1} parent=0 // pred_check
    _
  $region15: #{tpu_custom_call.1} parent=0 // pred_check_branch
    %578 = sbr.rel (0) target = $region17
  $region16: #{tpu_custom_call.1} parent=0 // pred_region
    _
  $region17: #{tpu_custom_call.1} parent=0 // pred_fallthru
    _
  // Predicated region
  $region18: #{tpu_custom_call.1} parent=0 // pred_check
    _
  $region19: #{tpu_custom_call.1} parent=0 // pred_check_branch
    %580 = sbr.rel (0) target = $region21
  $region20: #{tpu_custom_call.1} parent=0 // pred_region
    _
  $region21: #{tpu_custom_call.1} parent=0 // pred_fallthru
    _
  // Predicated region
  $region22: #{tpu_custom_call.1} parent=0 // pred_check
    _
  $region23: #{tpu_custom_call.1} parent=0 // pred_check_branch
    %582 = sbr.rel (0) target = $region25
  $region24: #{tpu_custom_call.1} parent=0 // pred_region
    _
  $region25: #{tpu_custom_call.1} parent=0 // pred_fallthru
    _
  // Predicated region
  $region26: #{tpu_custom_call.1} parent=0 // pred_check
    _
  $region27: #{tpu_custom_call.1} parent=0 // pred_check_branch
    %584 = sbr.rel (0) target = $region29
  $region28: #{tpu_custom_call.1} parent=0 // pred_region
    _
  $region29: #{tpu_custom_call.1} parent=0 // pred_fallthru
    _
  // Predicated region
  $region30: #{tpu_custom_call.1} parent=0 // pred_check
    _
  $region31: #{tpu_custom_call.1} parent=0 // pred_check_branch
    %586 = sbr.rel (0) target = $region33
  $region32: #{tpu_custom_call.1} parent=0 // pred_region
    _
  $region33: #{tpu_custom_call.1} parent=0 // pred_fallthru
    _

</llo_original>
